<compile_context>
chip_gen: v5e
topology: v5e:2x2
jax: 0.10.0
libtpu: 0.0.40
codegen_flags: <defaults>
</compile_context>

<pallas_src>
import jax
import jax.numpy as jnp
from jax.experimental import pallas as pl
from jax.experimental.pallas import tpu as pltpu


def _fused_mask_flow_kernel(w_ref, mask_ref, flow_ref):
    # w_ref: (1, TN, D); mask_ref: (1, TN, D-3); flow_ref: (1, TN, 3)   (float32, VMEM)
    x = w_ref[0]                                        # (TN, D)
    flow_ref[0] = x[:, :3]                              # pure slice -> second output
    logits = x[:, 3:]                                   # (TN, D-3)
    m = jnp.max(logits, axis=-1, keepdims=True)         # row-wise max (XLU)
    e = jnp.exp(logits - m)                             # EUP
    s = jnp.sum(e, axis=-1, keepdims=True)              # row-wise sum (XLU)
    mask_ref[0] = e / s                                 # exact normalization


def weights_model_forward(weights: jax.Array, tn: int = 16384):
    """weights: (1, N, D) float32, D > 3.
    Returns (mask, flow) with mask = softmax(weights[..., 3:], axis=2), flow = weights[..., :3].
    """
    one, n, d = weights.shape
    assert one == 1 and d > 3
    dm = d - 3

    # Tile the N axis.  Single full-extent block when N fits in one tile (no padding needed,
    # "equal to full dim" satisfies the layout constraint); otherwise use a multiple-of-8 tile
    # and let Pallas handle the ragged last block.
    if n <= tn:
        tn_eff = n
    else:
        tn_eff = max(8, (tn // 8) * 8)
    grid = (pl.cdiv(n, tn_eff),)

    cost = pl.CostEstimate(
        flops=5 * n * dm,                 # sub, exp-adjacent adds, sum, div (rough)
        transcendentals=n * dm,           # exp
        bytes_accessed=2 * n * d * 4,     # read weights once, write mask + flow once
    )

    mask, flow = pl.pallas_call(
        _fused_mask_flow_kernel,
        out_shape=(
            jax.ShapeDtypeStruct((1, n, dm), weights.dtype),
            jax.ShapeDtypeStruct((1, n, 3), weights.dtype),
        ),
        grid=grid,
        in_specs=[pl.BlockSpec((1, tn_eff, d), lambda i: (0, i, 0))],
        out_specs=(
            pl.BlockSpec((1, tn_eff, dm), lambda i: (0, i, 0)),
            pl.BlockSpec((1, tn_eff, 3), lambda i: (0, i, 0)),
        ),
        compiler_params=pltpu.CompilerParams(
            dimension_semantics=("parallel",),
        ),
        cost_estimate=cost,
    )(weights)

    return mask, flow


if __name__ == "__main__":
    key = jax.random.PRNGKey(0)
    k_pc, k_w, k_w2 = jax.random.split(key, 3)

    # Small synthetic point cloud: pc1 of shape (B, N, 3). Only N matters for the module.
    B, N, OUTPUT_DIM = 2, 64, 10
    pc1 = jax.random.normal(k_pc, (B, N, 3), dtype=jnp.float32)

    # Emulate Weights_model.update(pc1): weights ~ randn(1, pc1.shape[1], output_dim)
    # TODO(synk): Parameter creation / update() RNG lives in the host wrapper, not the kernel.
    weights = jax.random.normal(k_w, (1, pc1.shape[1], OUTPUT_DIM), dtype=jnp.float32)

    mask, flow = weights_model_forward(weights)
    jax.block_until_ready((mask, flow))

    # Reference check in plain JAX
    ref_flow = weights[..., :3]
    ref_mask = jax.nn.softmax(weights[..., 3:], axis=2)
    assert mask.shape == (1, N, OUTPUT_DIM - 3)
    assert flow.shape == (1, N, 3)
    assert jnp.allclose(flow, ref_flow)
    assert jnp.allclose(mask, ref_mask, rtol=1e-5, atol=1e-6)

    # Exercise the multi-tile + ragged-last-block path as well.
    N2 = 5000
    w2 = jax.random.normal(k_w2, (1, N2, OUTPUT_DIM), dtype=jnp.float32)
    m2, f2 = weights_model_forward(w2, tn=1024)
    jax.block_until_ready((m2, f2))
    assert m2.shape == (1, N2, OUTPUT_DIM - 3) and f2.shape == (1, N2, 3)
    assert jnp.allclose(f2, w2[..., :3])
    assert jnp.allclose(m2, jax.nn.softmax(w2[..., 3:], axis=2), rtol=1e-5, atol=1e-6)

    print("KERNEL_OK")
</pallas_src>

<mosaic_0001>
module attributes {stable_mosaic.version = 11 : i64} {
  func.func @_fused_mask_flow_kernel(%arg0: i32, %arg1: memref<1x64x10xf32, #tpu.memory_space<vmem>>, %arg2: memref<1x64x7xf32, #tpu.memory_space<vmem>>, %arg3: memref<1x64x3xf32, #tpu.memory_space<vmem>>) attributes {dimension_semantics = [#tpu.dimension_semantics<parallel>], iteration_bounds = array<i64: 1>, scalar_prefetch = 0 : i64, scratch_operands = 0 : i64, tpu.core_type = #tpu.core_type<tc>, window_params = [{transform_indices = @transform_0, window_bounds = array<i64: 1, 64, 10>}, {transform_indices = @transform_1, window_bounds = array<i64: 1, 64, 7>}, {transform_indices = @transform_2, window_bounds = array<i64: 1, 64, 3>}]} {
    %c0 = arith.constant 0 : index
    %c0_0 = arith.constant 0 : index
    %c0_1 = arith.constant 0 : index
    %0 = vector.load %arg1[%c0, %c0_0, %c0_1] : memref<1x64x10xf32, #tpu.memory_space<vmem>>, vector<1x64x10xf32>
    %1 = vector.shape_cast %0 : vector<1x64x10xf32> to vector<64x10xf32>
    %2 = vector.extract_strided_slice %1 {offsets = [0, 0], sizes = [64, 3], strides = [1, 1]} : vector<64x10xf32> to vector<64x3xf32>
    %c0_2 = arith.constant 0 : index
    %c0_3 = arith.constant 0 : index
    %c0_4 = arith.constant 0 : index
    %3 = vector.load %arg3[%c0_2, %c0_3, %c0_4] : memref<1x64x3xf32, #tpu.memory_space<vmem>>, vector<1x64x3xf32>
    %4 = vector.shape_cast %3 : vector<1x64x3xf32> to vector<64x3xf32>
    %5 = vector.shape_cast %2 : vector<64x3xf32> to vector<1x64x3xf32>
    tpu.vector_store %arg3[%c0_2, %c0_3, %c0_4], %5 {strides = array<i32>} : memref<1x64x3xf32, #tpu.memory_space<vmem>>, vector<1x64x3xf32>,
    %6 = vector.extract_strided_slice %1 {offsets = [0, 3], sizes = [64, 7], strides = [1, 1]} : vector<64x10xf32> to vector<64x7xf32>
    %cst = arith.constant dense<0xFF800000> : vector<64xf32>
    %7 = vector.multi_reduction <maximumf>, %6, %cst [1] : vector<64x7xf32> to vector<64xf32>
    %8 = vector.shape_cast %7 : vector<64xf32> to vector<64x1xf32>
    %9 = vector.broadcast %8 : vector<64x1xf32> to vector<64x7xf32>
    %10 = arith.subf %6, %9 : vector<64x7xf32>
    %11 = math.exp %10 : vector<64x7xf32>
    %cst_5 = arith.constant dense<0.000000e+00> : vector<64xf32>
    %12 = vector.multi_reduction <add>, %11, %cst_5 [1] : vector<64x7xf32> to vector<64xf32>
    %13 = vector.shape_cast %12 : vector<64xf32> to vector<64x1xf32>
    %14 = vector.broadcast %13 : vector<64x1xf32> to vector<64x7xf32>
    %15 = arith.divf %11, %14 : vector<64x7xf32>
    %c0_6 = arith.constant 0 : index
    %c0_7 = arith.constant 0 : index
    %c0_8 = arith.constant 0 : index
    %16 = vector.load %arg2[%c0_6, %c0_7, %c0_8] : memref<1x64x7xf32, #tpu.memory_space<vmem>>, vector<1x64x7xf32>
    %17 = vector.shape_cast %16 : vector<1x64x7xf32> to vector<64x7xf32>
    %18 = vector.shape_cast %15 : vector<64x7xf32> to vector<1x64x7xf32>
    tpu.vector_store %arg2[%c0_6, %c0_7, %c0_8], %18 {strides = array<i32>} : memref<1x64x7xf32, #tpu.memory_space<vmem>>, vector<1x64x7xf32>,
    return
  }
  func.func @transform_0(%arg0: i32) -> (i32, i32, i32) {
    %c0_i32 = arith.constant 0 : i32
    %c0_i32_0 = arith.constant 0 : i32
    %c0_i32_1 = arith.constant 0 : i32
    return %c0_i32, %arg0, %c0_i32_0 : i32, i32, i32
  }
  func.func @transform_1(%arg0: i32) -> (i32, i32, i32) {
    %c0_i32 = arith.constant 0 : i32
    %c0_i32_0 = arith.constant 0 : i32
    %c0_i32_1 = arith.constant 0 : i32
    return %c0_i32, %arg0, %c0_i32_0 : i32, i32, i32
  }
  func.func @transform_2(%arg0: i32) -> (i32, i32, i32) {
    %c0_i32 = arith.constant 0 : i32
    %c0_i32_0 = arith.constant 0 : i32
    %c0_i32_1 = arith.constant 0 : i32
    return %c0_i32, %arg0, %c0_i32_0 : i32, i32, i32
  }
}

</mosaic_0001>

<llo_original>
// kernel: tpu_custom_call.1
$region0: #{tpu_custom_call.1}
  #allocation0 [shape = 'u32[]', space=smem, size = 0x4, offset = 0x4, fixed_abs, tag = 'smem constant byte address 0x4 - core index']
  #allocation1 [shape = 'u32[72,128]{1,0:T(1,128)}', space=vmem, size = 0x9000, scoped, tag = 'internal scratch']
  %s0 = inlined_call_operand.vmem [shape: f32[1,64,10], index: 0, kind: input, shape index: {}]
  %s1 = inlined_call_operand.vmem [shape: f32[1,64,7], index: 1, kind: output, shape index: {0}]
  %s2 = inlined_call_operand.vmem [shape: f32[1,64,3], index: 2, kind: output, shape index: {1}]
  %3 = xla_tuple %s1, %s2
  %s4 = sld [smem:[#allocation0]]
  $region22: #{tpu_custom_call.1} parent=0
    _
  %s6 = ssub.s32 1, %s4
  %s7 = scalar_select 0, %s6, %s4
  // Predicated region
  $region2: #{tpu_custom_call.1} parent=0 // pred_check
    _
  $region3: #{tpu_custom_call.1} parent=0 // pred_check_branch
    %9 = sbr.rel (0) target = $region5
  $region4: #{tpu_custom_call.1} parent=0 // pred_region
    _
  $region5: #{tpu_custom_call.1} parent=0 // pred_fallthru
    _
  %v10 = vld [vmem:[%s0] sm:$0xff]
  %v11 = vld [vmem:[%s0 + $0x8] sm:$0xff]
  %v12 = vld [vmem:[%s0 + $0x10] sm:$0xff]
  %v13 = vld [vmem:[%s0 + $0x18] sm:$0xff]
  %v14 = vld [vmem:[%s0 + $0x20] sm:$0xff]
  %v15 = vld [vmem:[%s0 + $0x28] sm:$0xff]
  %v16 = vld [vmem:[%s0 + $0x30] sm:$0xff]
  %v17 = vld [vmem:[%s0 + $0x38] sm:$0xff]
  %vm18 = vcmask 23552
  %19 = vst.msk [vmem:[%s2] sm:$0xff] %vm18, %v10
  %20 = vst.msk [vmem:[%s2 + $0x8] sm:$0xff] %vm18, %v11
  %21 = vst.msk [vmem:[%s2 + $0x10] sm:$0xff] %vm18, %v12
  %22 = vst.msk [vmem:[%s2 + $0x18] sm:$0xff] %vm18, %v13
  %23 = vst.msk [vmem:[%s2 + $0x20] sm:$0xff] %vm18, %v14
  %24 = vst.msk [vmem:[%s2 + $0x28] sm:$0xff] %vm18, %v15
  %25 = vst.msk [vmem:[%s2 + $0x30] sm:$0xff] %vm18, %v16
  %26 = vst.msk [vmem:[%s2 + $0x38] sm:$0xff] %vm18, %v17
  %vm27 = vcmask 80920
  %v28 = vsel %vm27, %v10, -inf
  %29 = vmax.xlane.f32.xlu0 %v28
  %v30 = vpop.xlane.xlu0 %29
  %v31 = vsel %vm27, %v11, -inf
  %32 = vmax.xlane.f32.xlu0 %v31
  %v33 = vpop.xlane.xlu0 %32
  %v34 = vsel %vm27, %v12, -inf
  %35 = vmax.xlane.f32.xlu0 %v34
  %v36 = vpop.xlane.xlu0 %35
  %v37 = vsel %vm27, %v13, -inf
  %38 = vmax.xlane.f32.xlu0 %v37
  %v39 = vpop.xlane.xlu0 %38
  %v40 = vsel %vm27, %v14, -inf
  %41 = vmax.xlane.f32.xlu0 %v40
  %v42 = vpop.xlane.xlu0 %41
  %v43 = vsel %vm27, %v15, -inf
  %44 = vmax.xlane.f32.xlu0 %v43
  %v45 = vpop.xlane.xlu0 %44
  %v46 = vsel %vm27, %v16, -inf
  %47 = vmax.xlane.f32.xlu0 %v46
  %v48 = vpop.xlane.xlu0 %47
  %v49 = vsel %vm27, %v17, -inf
  %50 = vmax.xlane.f32.xlu0 %v49
  %v51 = vpop.xlane.xlu0 %50
  %v52 = vsub.f32 %v10, %v30
  %v53 = vsub.f32 %v11, %v33
  %v54 = vsub.f32 %v12, %v36
  %v55 = vsub.f32 %v13, %v39
  %v56 = vsub.f32 %v14, %v42
  %v57 = vsub.f32 %v15, %v45
  %v58 = vsub.f32 %v16, %v48
  %v59 = vsub.f32 %v17, %v51
  %v60 = vmul.f32 %v52, 1.442695
  %v61 = vpow.pop %v60
  %v62 = vmul.f32 %v53, 1.442695
  %v63 = vpow.pop %v62
  %v64 = vmul.f32 %v54, 1.442695
  %v65 = vpow.pop %v64
  %v66 = vmul.f32 %v55, 1.442695
  %v67 = vpow.pop %v66
  %v68 = vmul.f32 %v56, 1.442695
  %v69 = vpow.pop %v68
  %v70 = vmul.f32 %v57, 1.442695
  %v71 = vpow.pop %v70
  %v72 = vmul.f32 %v58, 1.442695
  %v73 = vpow.pop %v72
  %v74 = vmul.f32 %v59, 1.442695
  %v75 = vpow.pop %v74
  %84 = vrot.lane.b32.xlu0 %v61, 125
  %v85 = vpop.permute.xlu0 %84
  %86 = vrot.lane.b32.xlu0 %v63, 125
  %v87 = vpop.permute.xlu0 %86
  %88 = vrot.lane.b32.xlu0 %v65, 125
  %v89 = vpop.permute.xlu0 %88
  %90 = vrot.lane.b32.xlu0 %v67, 125
  %v91 = vpop.permute.xlu0 %90
  %92 = vrot.lane.b32.xlu0 %v69, 125
  %v93 = vpop.permute.xlu0 %92
  %94 = vrot.lane.b32.xlu0 %v71, 125
  %v95 = vpop.permute.xlu0 %94
  %96 = vrot.lane.b32.xlu0 %v73, 125
  %v97 = vpop.permute.xlu0 %96
  %98 = vrot.lane.b32.xlu0 %v75, 125
  %v99 = vpop.permute.xlu0 %98
  %vm108 = vcmask 56320
  %v109 = vsel %vm108, %v85, 0.0
  %110 = vadd.xlane.f32.xlu0 %v109
  %v111 = vpop.xlane.xlu0 %110
  %v112 = vsel %vm108, %v87, 0.0
  %113 = vadd.xlane.f32.xlu0 %v112
  %v114 = vpop.xlane.xlu0 %113
  %v115 = vsel %vm108, %v89, 0.0
  %116 = vadd.xlane.f32.xlu0 %v115
  %v117 = vpop.xlane.xlu0 %116
  %v118 = vsel %vm108, %v91, 0.0
  %119 = vadd.xlane.f32.xlu0 %v118
  %v120 = vpop.xlane.xlu0 %119
  %v121 = vsel %vm108, %v93, 0.0
  %122 = vadd.xlane.f32.xlu0 %v121
  %v123 = vpop.xlane.xlu0 %122
  %v124 = vsel %vm108, %v95, 0.0
  %125 = vadd.xlane.f32.xlu0 %v124
  %v126 = vpop.xlane.xlu0 %125
  %v127 = vsel %vm108, %v97, 0.0
  %128 = vadd.xlane.f32.xlu0 %v127
  %v129 = vpop.xlane.xlu0 %128
  %v130 = vsel %vm108, %v99, 0.0
  %131 = vadd.xlane.f32.xlu0 %v130
  %v132 = vpop.xlane.xlu0 %131
  %v133 = vrcp.pop %v111
  %v134 = vmul.f32 %v111, %v133
  %v135 = vsub.f32 1.0, %v134
  %v136 = vmul.f32 %v133, %v135
  %v137 = vadd.f32 %v133, %v136
  %vm138 = vweird.f32 %v111
  %vm139 = vweird.f32 %v133
  %vm140 = vmor %vm138, %vm139
  %v141 = vsel %vm140, %v133, %v137
  %v142 = vand.u32 2147483647, %v111
  %vm143 = vcmp.eq.f32.partialorder %v142, 8.507059e+37
  %v144 = vand.u32 %v111, 2147483648
  %v145 = vor.u32 1.1754944e-38, %v144
  %v146 = vsel %vm143, %v145, %v141
  %v147 = vmul.f32 %v61, %v146
  %v148 = vrcp.pop %v114
  %v149 = vmul.f32 %v114, %v148
  %v150 = vsub.f32 1.0, %v149
  %v151 = vmul.f32 %v148, %v150
  %v152 = vadd.f32 %v148, %v151
  %vm153 = vweird.f32 %v114
  %vm154 = vweird.f32 %v148
  %vm155 = vmor %vm153, %vm154
  %v156 = vsel %vm155, %v148, %v152
  %v157 = vand.u32 2147483647, %v114
  %vm158 = vcmp.eq.f32.partialorder %v157, 8.507059e+37
  %v159 = vand.u32 %v114, 2147483648
  %v160 = vor.u32 1.1754944e-38, %v159
  %v161 = vsel %vm158, %v160, %v156
  %v162 = vmul.f32 %v63, %v161
  %v163 = vrcp.pop %v117
  %v164 = vmul.f32 %v117, %v163
  %v165 = vsub.f32 1.0, %v164
  %v166 = vmul.f32 %v163, %v165
  %v167 = vadd.f32 %v163, %v166
  %vm168 = vweird.f32 %v117
  %vm169 = vweird.f32 %v163
  %vm170 = vmor %vm168, %vm169
  %v171 = vsel %vm170, %v163, %v167
  %v172 = vand.u32 2147483647, %v117
  %vm173 = vcmp.eq.f32.partialorder %v172, 8.507059e+37
  %v174 = vand.u32 %v117, 2147483648
  %v175 = vor.u32 1.1754944e-38, %v174
  %v176 = vsel %vm173, %v175, %v171
  %v177 = vmul.f32 %v65, %v176
  %v178 = vrcp.pop %v120
  %v179 = vmul.f32 %v120, %v178
  %v180 = vsub.f32 1.0, %v179
  %v181 = vmul.f32 %v178, %v180
  %v182 = vadd.f32 %v178, %v181
  %vm183 = vweird.f32 %v120
  %vm184 = vweird.f32 %v178
  %vm185 = vmor %vm183, %vm184
  %v186 = vsel %vm185, %v178, %v182
  %v187 = vand.u32 2147483647, %v120
  %vm188 = vcmp.eq.f32.partialorder %v187, 8.507059e+37
  %v189 = vand.u32 %v120, 2147483648
  %v190 = vor.u32 1.1754944e-38, %v189
  %v191 = vsel %vm188, %v190, %v186
  %v192 = vmul.f32 %v67, %v191
  %v193 = vrcp.pop %v123
  %v194 = vmul.f32 %v123, %v193
  %v195 = vsub.f32 1.0, %v194
  %v196 = vmul.f32 %v193, %v195
  %v197 = vadd.f32 %v193, %v196
  %vm198 = vweird.f32 %v123
  %vm199 = vweird.f32 %v193
  %vm200 = vmor %vm198, %vm199
  %v201 = vsel %vm200, %v193, %v197
  %v202 = vand.u32 2147483647, %v123
  %vm203 = vcmp.eq.f32.partialorder %v202, 8.507059e+37
  %v204 = vand.u32 %v123, 2147483648
  %v205 = vor.u32 1.1754944e-38, %v204
  %v206 = vsel %vm203, %v205, %v201
  %v207 = vmul.f32 %v69, %v206
  %v208 = vrcp.pop %v126
  %v209 = vmul.f32 %v126, %v208
  %v210 = vsub.f32 1.0, %v209
  %v211 = vmul.f32 %v208, %v210
  %v212 = vadd.f32 %v208, %v211
  %vm213 = vweird.f32 %v126
  %vm214 = vweird.f32 %v208
  %vm215 = vmor %vm213, %vm214
  %v216 = vsel %vm215, %v208, %v212
  %v217 = vand.u32 2147483647, %v126
  %vm218 = vcmp.eq.f32.partialorder %v217, 8.507059e+37
  %v219 = vand.u32 %v126, 2147483648
  %v220 = vor.u32 1.1754944e-38, %v219
  %v221 = vsel %vm218, %v220, %v216
  %v222 = vmul.f32 %v71, %v221
  %v223 = vrcp.pop %v129
  %v224 = vmul.f32 %v129, %v223
  %v225 = vsub.f32 1.0, %v224
  %v226 = vmul.f32 %v223, %v225
  %v227 = vadd.f32 %v223, %v226
  %vm228 = vweird.f32 %v129
  %vm229 = vweird.f32 %v223
  %vm230 = vmor %vm228, %vm229
  %v231 = vsel %vm230, %v223, %v227
  %v232 = vand.u32 2147483647, %v129
  %vm233 = vcmp.eq.f32.partialorder %v232, 8.507059e+37
  %v234 = vand.u32 %v129, 2147483648
  %v235 = vor.u32 1.1754944e-38, %v234
  %v236 = vsel %vm233, %v235, %v231
  %v237 = vmul.f32 %v73, %v236
  %v238 = vrcp.pop %v132
  %v239 = vmul.f32 %v132, %v238
  %v240 = vsub.f32 1.0, %v239
  %v241 = vmul.f32 %v238, %v240
  %v242 = vadd.f32 %v238, %v241
  %vm243 = vweird.f32 %v132
  %vm244 = vweird.f32 %v238
  %vm245 = vmor %vm243, %vm244
  %v246 = vsel %vm245, %v238, %v242
  %v247 = vand.u32 2147483647, %v132
  %vm248 = vcmp.eq.f32.partialorder %v247, 8.507059e+37
  %v249 = vand.u32 %v132, 2147483648
  %v250 = vor.u32 1.1754944e-38, %v249
  %v251 = vsel %vm248, %v250, %v246
  %v252 = vmul.f32 %v75, %v251
  %261 = vrot.lane.b32.xlu0 %v147, 125
  %v262 = vpop.permute.xlu0 %261
  %263 = vrot.lane.b32.xlu0 %v162, 125
  %v264 = vpop.permute.xlu0 %263
  %265 = vrot.lane.b32.xlu0 %v177, 125
  %v266 = vpop.permute.xlu0 %265
  %267 = vrot.lane.b32.xlu0 %v192, 125
  %v268 = vpop.permute.xlu0 %267
  %269 = vrot.lane.b32.xlu0 %v207, 125
  %v270 = vpop.permute.xlu0 %269
  %271 = vrot.lane.b32.xlu0 %v222, 125
  %v272 = vpop.permute.xlu0 %271
  %273 = vrot.lane.b32.xlu0 %v237, 125
  %v274 = vpop.permute.xlu0 %273
  %275 = vrot.lane.b32.xlu0 %v252, 125
  %v276 = vpop.permute.xlu0 %275
  %285 = vst.msk [vmem:[%s1] sm:$0xff] %vm108, %v262
  %286 = vst.msk [vmem:[%s1 + $0x8] sm:$0xff] %vm108, %v264
  %287 = vst.msk [vmem:[%s1 + $0x10] sm:$0xff] %vm108, %v266
  %288 = vst.msk [vmem:[%s1 + $0x18] sm:$0xff] %vm108, %v268
  %289 = vst.msk [vmem:[%s1 + $0x20] sm:$0xff] %vm108, %v270
  %290 = vst.msk [vmem:[%s1 + $0x28] sm:$0xff] %vm108, %v272
  %291 = vst.msk [vmem:[%s1 + $0x30] sm:$0xff] %vm108, %v274
  %292 = vst.msk [vmem:[%s1 + $0x38] sm:$0xff] %vm108, %v276
  // Predicated region
  $region6: #{tpu_custom_call.1} parent=0 // pred_check
    _
  $region7: #{tpu_custom_call.1} parent=0 // pred_check_branch
    %294 = sbr.rel (0) target = $region9
  $region8: #{tpu_custom_call.1} parent=0 // pred_region
    _
  $region9: #{tpu_custom_call.1} parent=0 // pred_fallthru
    _
  // Predicated region
  $region10: #{tpu_custom_call.1} parent=0 // pred_check
    _
  $region11: #{tpu_custom_call.1} parent=0 // pred_check_branch
    %296 = sbr.rel (0) target = $region13
  $region12: #{tpu_custom_call.1} parent=0 // pred_region
    _
  $region13: #{tpu_custom_call.1} parent=0 // pred_fallthru
    _
  // Predicated region
  $region14: #{tpu_custom_call.1} parent=0 // pred_check
    _
  $region15: #{tpu_custom_call.1} parent=0 // pred_check_branch
    %298 = sbr.rel (0) target = $region17
  $region16: #{tpu_custom_call.1} parent=0 // pred_region
    _
  $region17: #{tpu_custom_call.1} parent=0 // pred_fallthru
    _
  // Predicated region
  $region18: #{tpu_custom_call.1} parent=0 // pred_check
    _
  $region19: #{tpu_custom_call.1} parent=0 // pred_check_branch
    %300 = sbr.rel (0) target = $region21
  $region20: #{tpu_custom_call.1} parent=0 // pred_region
    _
  $region21: #{tpu_custom_call.1} parent=0 // pred_fallthru
    _

</llo_original>
